<compile_context>
chip_gen: v7x
topology: tpu7x:2x2x1
jax: 0.10.0
libtpu: 0.0.40
codegen_flags: <defaults>
</compile_context>

<pallas_src>
import functools

import jax
import jax.numpy as jnp
from jax.experimental import pallas as pl
from jax.experimental.pallas import tpu as pltpu

_IGNORE_INDEX = -100  # matches torch.nn.functional.cross_entropy default


def _round_up(x, m):
    return ((x + m - 1) // m) * m


def _ce_kernel(logits_ref, labels_ref, nll_ref, *, n_rows, block_rows, ignore_index):
    i = pl.program_id(0)

    x = logits_ref[...].astype(jnp.float32)               # (tm, V) f32
    labels = labels_ref[...]                               # (tm, 1) int32

    # numerically-stable log-softmax pieces
    m = jnp.max(x, axis=-1, keepdims=True)                 # (tm, 1)
    xm = x - m                                             # (tm, V)
    sumexp = jnp.sum(jnp.exp(xm), axis=-1, keepdims=True)  # (tm, 1)

    # target logit (shifted) via a single select; the "+ m" cancels in the NLL
    vocab_ids = jax.lax.broadcasted_iota(jnp.int32, x.shape, 1)
    tgt_shift = jnp.sum(
        jnp.where(vocab_ids == labels, xm, 0.0), axis=-1, keepdims=True
    )                                                      # (tm, 1) == tgt - m

    nll = jnp.log(sumexp) - tgt_shift                      # (tm, 1) per-row NLL

    # mask out padded rows and ignore_index labels
    row_ids = i * block_rows + jax.lax.broadcasted_iota(jnp.int32, nll.shape, 0)
    valid = (row_ids < n_rows) & (labels != ignore_index)
    nll_ref[...] = jnp.where(valid, nll, 0.0)


class CELoss:
    """Pallas port of the PyTorch CELoss module (no learnable parameters)."""

    def __init__(self, vocab_size):
        self.vocab_size = vocab_size

    def __call__(self, logits, texts, **batch):
        # logits: (B, T-1, V) float ; texts: (B, T) int (teacher-forcing shift)
        B, Tm1, V = logits.shape
        assert V == self.vocab_size
        N = B * Tm1

        # keep the model's dtype in HBM (bf16 stays bf16); upcast happens in-kernel
        logits2 = logits.reshape(N, V)
        labels = texts[:, 1:].reshape(N, 1).astype(jnp.int32)

        # ---- row-tile sizing: biggest tile with ~4 MiB logits blocks ----
        itemsize = jnp.dtype(logits2.dtype).itemsize
        row_bytes = V * itemsize
        target_block_bytes = 4 << 20
        tm = max(8, min(1024, target_block_bytes // max(row_bytes, 1)))
        tm = min(tm, _round_up(N, 8))
        tm = max(8, (tm // 8) * 8)

        n_blocks = pl.cdiv(N, tm)
        n_pad = n_blocks * tm
        if n_pad != N:
            logits2 = jnp.pad(logits2, ((0, n_pad - N), (0, 0)))
            labels = jnp.pad(labels, ((0, n_pad - N), (0, 0)))

        # VMEM budget (lane-padded estimate) — explicit so v5e (16 MiB default
        # scoped) and v7x (64 MiB physical) both get a working pipeline.
        lanes = _round_up(V, 128)
        blk_vmem = tm * lanes * itemsize            # logits block
        aux_vmem = 2 * tm * 128 * 4                 # labels + nll blocks (lane-padded)
        vmem_limit = int(min(48 << 20,
                             max(16 << 20, 3 * (blk_vmem + aux_vmem) + (2 << 20))))

        kernel = functools.partial(
            _ce_kernel, n_rows=N, block_rows=tm, ignore_index=_IGNORE_INDEX
        )

        nll = pl.pallas_call(
            kernel,
            out_shape=jax.ShapeDtypeStruct((n_pad, 1), jnp.float32),
            grid_spec=pltpu.PrefetchScalarGridSpec(
                num_scalar_prefetch=0,
                grid=(n_blocks,),
                in_specs=[
                    pl.BlockSpec((tm, V), lambda i: (i, 0)),   # logits rows
                    pl.BlockSpec((tm, 1), lambda i: (i, 0)),   # labels rows
                ],
                out_specs=pl.BlockSpec((tm, 1), lambda i: (i, 0)),  # per-row NLL
            ),
            compiler_params=pltpu.CompilerParams(
                dimension_semantics=("parallel",),
                vmem_limit_bytes=vmem_limit,
            ),
        )(logits2, labels)

        # mean over non-ignored tokens (PyTorch cross_entropy default reduction)
        n_valid = jnp.maximum(
            jnp.sum((labels[:N] != _IGNORE_INDEX).astype(jnp.float32)), 1.0
        )
        loss = jnp.sum(nll) / n_valid
        return {"loss": loss}


def _reference_ce(logits, texts, vocab_size):
    x = logits.reshape(-1, vocab_size).astype(jnp.float32)
    y = texts[:, 1:].reshape(-1)
    logp = jax.nn.log_softmax(x, axis=-1)
    nll = -jnp.take_along_axis(logp, y[:, None], axis=-1)[:, 0]
    return jnp.mean(nll)


if __name__ == "__main__":
    key = jax.random.PRNGKey(0)

    # case 1: N divisible by 8
    B, T, V = 2, 9, 32          # N = B*(T-1) = 16 rows
    k1, k2, k3, k4 = jax.random.split(key, 4)
    logits = jax.random.normal(k1, (B, T - 1, V), dtype=jnp.float32)
    texts = jax.random.randint(k2, (B, T), 0, V, dtype=jnp.int32)

    loss_fn = CELoss(vocab_size=V)
    out = loss_fn(logits, texts)
    loss = jax.block_until_ready(out["loss"])
    ref = _reference_ce(logits, texts, V)
    assert jnp.allclose(loss, ref, atol=1e-5, rtol=1e-5), (loss, ref)

    # case 2: N NOT divisible by 8 (exercises row padding + in-kernel mask)
    B2, T2 = 3, 14              # N = 39 rows
    logits2 = jax.random.normal(k3, (B2, T2 - 1, V), dtype=jnp.float32)
    texts2 = jax.random.randint(k4, (B2, T2), 0, V, dtype=jnp.int32)
    out2 = loss_fn(logits2, texts2)
    loss2 = jax.block_until_ready(out2["loss"])
    ref2 = _reference_ce(logits2, texts2, V)
    assert jnp.allclose(loss2, ref2, atol=1e-5, rtol=1e-5), (loss2, ref2)

    print("KERNEL_OK")
</pallas_src>

<mosaic_0001>
module attributes {stable_mosaic.version = 11 : i64} {
  func.func @_ce_kernel(%arg0: i32, %arg1: memref<16x32xf32, #tpu.memory_space<vmem>>, %arg2: memref<16x1xi32, #tpu.memory_space<vmem>>, %arg3: memref<16x1xf32, #tpu.memory_space<vmem>>) attributes {dimension_semantics = [#tpu.dimension_semantics<parallel>], iteration_bounds = array<i64: 1>, scalar_prefetch = 0 : i64, scratch_operands = 0 : i64, tpu.core_type = #tpu.core_type<tc>, window_params = [{transform_indices = @transform_0, window_bounds = array<i64: 16, 32>}, {transform_indices = @transform_1, window_bounds = array<i64: 16, 1>}, {transform_indices = @transform_2, window_bounds = array<i64: 16, 1>}]} {
    %c0 = arith.constant 0 : index
    %c0_0 = arith.constant 0 : index
    %0 = vector.load %arg1[%c0, %c0_0] : memref<16x32xf32, #tpu.memory_space<vmem>>, vector<16x32xf32>
    %c0_1 = arith.constant 0 : index
    %c0_2 = arith.constant 0 : index
    %1 = vector.load %arg2[%c0_1, %c0_2] : memref<16x1xi32, #tpu.memory_space<vmem>>, vector<16x1xi32>
    %cst = arith.constant dense<0xFF800000> : vector<16xf32>
    %2 = vector.multi_reduction <maximumf>, %0, %cst [1] : vector<16x32xf32> to vector<16xf32>
    %3 = vector.shape_cast %2 : vector<16xf32> to vector<16x1xf32>
    %4 = vector.broadcast %3 : vector<16x1xf32> to vector<16x32xf32>
    %5 = arith.subf %0, %4 : vector<16x32xf32>
    %6 = math.exp %5 : vector<16x32xf32>
    %cst_3 = arith.constant dense<0.000000e+00> : vector<16xf32>
    %7 = vector.multi_reduction <add>, %6, %cst_3 [1] : vector<16x32xf32> to vector<16xf32>
    %8 = vector.shape_cast %7 : vector<16xf32> to vector<16x1xf32>
    %9 = tpu.iota {dimensions = array<i32: 1>} : vector<16x32xi32>
    %10 = vector.broadcast %1 : vector<16x1xi32> to vector<16x32xi32>
    %11 = arith.cmpi eq, %9, %10 : vector<16x32xi32>
    %cst_4 = arith.constant 0.000000e+00 : f32
    %12 = vector.broadcast %cst_4 : f32 to vector<16x32xf32>
    %13 = arith.select %11, %5, %12 : vector<16x32xi1>, vector<16x32xf32>
    %cst_5 = arith.constant dense<0.000000e+00> : vector<16xf32>
    %14 = vector.multi_reduction <add>, %13, %cst_5 [1] : vector<16x32xf32> to vector<16xf32>
    %15 = vector.shape_cast %14 : vector<16xf32> to vector<16x1xf32>
    %16 = math.log %8 : vector<16x1xf32>
    %17 = arith.subf %16, %15 : vector<16x1xf32>
    %c16_i32 = arith.constant 16 : i32
    %18 = arith.muli %arg0, %c16_i32 : i32
    %19 = tpu.iota {dimensions = array<i32: 0>} : vector<16x1xi32>
    %20 = vector.broadcast %18 : i32 to vector<16x1xi32>
    %21 = arith.addi %20, %19 : vector<16x1xi32>
    %c16_i32_6 = arith.constant 16 : i32
    %22 = vector.broadcast %c16_i32_6 : i32 to vector<16x1xi32>
    %23 = arith.cmpi slt, %21, %22 : vector<16x1xi32>
    %c-100_i32 = arith.constant -100 : i32
    %24 = vector.broadcast %c-100_i32 : i32 to vector<16x1xi32>
    %25 = arith.cmpi ne, %1, %24 : vector<16x1xi32>
    %26 = arith.andi %23, %25 : vector<16x1xi1>
    %cst_7 = arith.constant 0.000000e+00 : f32
    %27 = vector.broadcast %cst_7 : f32 to vector<16x1xf32>
    %28 = arith.select %26, %17, %27 : vector<16x1xi1>, vector<16x1xf32>
    %c0_8 = arith.constant 0 : index
    %c0_9 = arith.constant 0 : index
    %29 = vector.load %arg3[%c0_8, %c0_9] : memref<16x1xf32, #tpu.memory_space<vmem>>, vector<16x1xf32>
    tpu.vector_store %arg3[%c0_8, %c0_9], %28 {strides = array<i32>} : memref<16x1xf32, #tpu.memory_space<vmem>>, vector<16x1xf32>,
    return
  }
  func.func @transform_0(%arg0: i32) -> (i32, i32) {
    %c0_i32 = arith.constant 0 : i32
    %c0_i32_0 = arith.constant 0 : i32
    return %arg0, %c0_i32 : i32, i32
  }
  func.func @transform_1(%arg0: i32) -> (i32, i32) {
    %c0_i32 = arith.constant 0 : i32
    %c0_i32_0 = arith.constant 0 : i32
    return %arg0, %c0_i32 : i32, i32
  }
  func.func @transform_2(%arg0: i32) -> (i32, i32) {
    %c0_i32 = arith.constant 0 : i32
    %c0_i32_0 = arith.constant 0 : i32
    return %arg0, %c0_i32 : i32, i32
  }
}

</mosaic_0001>

<llo_original>
// kernel: tpu_custom_call.1
$region0: #{tpu_custom_call.1}
  #allocation0 [shape = 'u32[]', space=smem, size = 0x4, offset = 0x4, fixed_abs, tag = 'smem constant byte address 0x4 - core index']
  #allocation1 [shape = 'u32[144,128]{1,0:T(1,128)}', space=vmem, size = 0x12000, scoped, tag = 'internal scratch']
  %s0 = inlined_call_operand.vmem [shape: f32[16,32], index: 0, kind: input, shape index: {}]
  %s1 = inlined_call_operand.vmem [shape: s32[16,1], index: 1, kind: input, shape index: {}]
  %s2 = inlined_call_operand.vmem [shape: f32[16,1], index: 2, kind: output, shape index: {}]
  %s3 = sld [smem:[#allocation0]]
  $region18: #{tpu_custom_call.1} parent=0
    _
  %s5 = ssub.s32 1, %s3
  %s6 = scalar_select 0, %s5, %s3
  // Predicated region
  $region2: #{tpu_custom_call.1} parent=0 // pred_check
    _
  $region3: #{tpu_custom_call.1} parent=0 // pred_check_branch
    %8 = sbr.rel (0) target = $region5
  $region4: #{tpu_custom_call.1} parent=0 // pred_region
    _
  $region5: #{tpu_custom_call.1} parent=0 // pred_fallthru
    _
  // Predicated region
  $region6: #{tpu_custom_call.1} parent=0 // pred_check
    _
  $region7: #{tpu_custom_call.1} parent=0 // pred_check_branch
    %10 = sbr.rel (0) target = $region9
  $region8: #{tpu_custom_call.1} parent=0 // pred_region
    _
  $region9: #{tpu_custom_call.1} parent=0 // pred_fallthru
    _
  %v11 = vld [vmem:[%s0] sm:$0xff]
  %v12 = vld [vmem:[%s0 + $0x8] sm:$0xff]
  %v13 = vld [vmem:[%s1] sm:$0xff]
  %v14 = vld [vmem:[%s1 + $0x8] sm:$0xff]
  %vm15 = vcmask 261120
  %v16 = vsel %vm15, %v11, -inf
  %17 = vmax.xlane.f32.xlu0 %v16
  %v18 = vpop.xlane.xlu0 %17
  %v19 = vsel %vm15, %v12, -inf
  %20 = vmax.xlane.f32.xlu0 %v19
  %v21 = vpop.xlane.xlu0 %20
  %v22 = vsub.f32 %v11, %v18
  %v23 = vsub.f32 %v12, %v21
  %v24 = vmul.f32 %v22, 1.442695
  %v25 = vpow.pop %v24
  %v26 = vmul.f32 %v23, 1.442695
  %v27 = vpow.pop %v26
  %v28 = vsel %vm15, %v25, 0.0
  %29 = vadd.xlane.f32.xlu0 %v28
  %v30 = vpop.xlane.xlu0 %29
  %v31 = vsel %vm15, %v27, 0.0
  %32 = vadd.xlane.f32.xlu0 %v31
  %v33 = vpop.xlane.xlu0 %32
  %v34 = vlaneseq
  %v35 = vand.u32 %v34, 127
  %36 = vset.pattern.permute.xlu0 0
  %37 = vperm.xlu0 %36, %v13
  %v38 = vpop.permute.xlu0 %37
  %39 = vset.pattern.permute.xlu0 0
  %40 = vperm.xlu0 %39, %v14
  %v41 = vpop.permute.xlu0 %40
  %vm42 = vcmp.eq.s32.totalorder %v35, %v38
  %vm43 = vcmp.eq.s32.totalorder %v35, %v41
  %v44 = vsel %vm42, %v22, 0.0
  %v45 = vsel %vm43, %v23, 0.0
  %v46 = vsel %vm15, %v44, 0.0
  %47 = vadd.xlane.f32.xlu0 %v46
  %v48 = vpop.xlane.xlu0 %47
  %v49 = vsel %vm15, %v45, 0.0
  %50 = vadd.xlane.f32.xlu0 %v49
  %v51 = vpop.xlane.xlu0 %50
  %v52 = vlog2.pop %v30
  %v53 = vmul.f32 %v52, 0.6931472
  %v54 = vlog2.pop %v33
  %v55 = vmul.f32 %v54, 0.6931472
  %v56 = vsub.f32 %v53, %v48
  %v57 = vsub.f32 %v55, %v51
  %s58 = smul.u32 0, 16
  %v59 = vlaneseq
  %v60 = vshrl.u32 %v59, 7
  %v61 = vadd.s32 %v60, 8
  %v62 = vstv %s58
  %v63 = vadd.s32 %v62, %v60
  %v64 = vadd.s32 %v62, %v61
  %vm65 = vcmp.lt.s32.totalorder %v63, 16
  %vm66 = vcmp.lt.s32.totalorder %v64, 16
  %vm67 = vcmp.ne.s32.totalorder %v13, 4294967196
  %vm68 = vcmp.ne.s32.totalorder %v14, 4294967196
  %vm69 = vmand %vm65, %vm67
  %vm70 = vmand %vm66, %vm68
  %v71 = vsel %vm69, %v56, 0.0
  %v72 = vsel %vm70, %v57, 0.0
  %vm73 = vcmask 7168
  %74 = vst.msk [vmem:[%s2] sm:$0xff] %vm73, %v71
  %75 = vst.msk [vmem:[%s2 + $0x8] sm:$0xff] %vm73, %v72
  // Predicated region
  $region10: #{tpu_custom_call.1} parent=0 // pred_check
    _
  $region11: #{tpu_custom_call.1} parent=0 // pred_check_branch
    %77 = sbr.rel (0) target = $region13
  $region12: #{tpu_custom_call.1} parent=0 // pred_region
    _
  $region13: #{tpu_custom_call.1} parent=0 // pred_fallthru
    _
  // Predicated region
  $region14: #{tpu_custom_call.1} parent=0 // pred_check
    _
  $region15: #{tpu_custom_call.1} parent=0 // pred_check_branch
    %79 = sbr.rel (0) target = $region17
  $region16: #{tpu_custom_call.1} parent=0 // pred_region
    _
  $region17: #{tpu_custom_call.1} parent=0 // pred_fallthru
    _

</llo_original>
